<compile_context>
chip_gen: v7x
topology: tpu7x:2x2x1
jax: 0.10.0
libtpu: 0.0.40
codegen_flags: <defaults>
</compile_context>

<pallas_src>
import functools

import jax
import jax.numpy as jnp
from jax.experimental import pallas as pl
from jax.experimental.pallas import tpu as pltpu

EPSILON = 1e-6
_LANES = 128
_SUBLANES = 8


def _dice_partial_kernel(pred_ref, mask_ref, inter_ref, card_ref, *,
                         tile_r, k_true, needs_mask):
    # pred_ref / mask_ref: (M, tile_r, 128); inter_ref / card_ref: (M, 128)
    n = pl.program_id(1)

    @pl.when(n == 0)
    def _():
        inter_ref[...] = jnp.zeros_like(inter_ref)
        card_ref[...] = jnp.zeros_like(card_ref)

    p = pred_ref[...].astype(jnp.float32)
    m = mask_ref[...].astype(jnp.float32)

    # sigmoid(x) == 0.5 * (tanh(x/2) + 1): single EUP transcendental per element.
    prob = 0.5 * (jnp.tanh(0.5 * p) + 1.0)

    pm = prob * m      # intersection contribution
    pc = prob + m      # cardinality contribution

    if needs_mask:
        # Mask out-of-range elements of the (logically padded) last tile.
        rows = jax.lax.broadcasted_iota(jnp.int32, (tile_r, _LANES), 0)
        lanes = jax.lax.broadcasted_iota(jnp.int32, (tile_r, _LANES), 1)
        flat = (n * tile_r + rows) * _LANES + lanes
        valid = (flat < k_true)[None, :, :]
        pm = jnp.where(valid, pm, 0.0)
        pc = jnp.where(valid, pc, 0.0)

    # Lane-wide partial sums: only a cross-sublane reduce per tile; the
    # running accumulation stays on the VPU in the resident output block.
    inter_ref[...] += jnp.sum(pm, axis=1)
    card_ref[...] += jnp.sum(pc, axis=1)


def _round_up(x, m):
    return (x + m - 1) // m * m


def _vmem_capacity_bytes():
    try:
        info = pltpu.get_tpu_info()
        return int(getattr(info, "vmem_capacity_bytes", 64 << 20))
    except Exception:
        return 64 << 20  # conservative (v7x) default


def _pick_tiling(r, m, bytes_per_elem):
    """Pick tile_r (rows of 128 lanes per grid step) from VMEM capacity."""
    vmem_cap = _vmem_capacity_bytes()
    # Budget for the double-buffered input pipeline *plus* in-kernel f32
    # temporaries (~6 live f32 arrays worst case -> +24 B / element).
    budget_total = min(32 << 20, (vmem_cap * 3) // 8)
    per_elem_bytes = 2 * bytes_per_elem + 24
    elems_per_block = max(1, budget_total // per_elem_bytes)
    tile_r = elems_per_block // (m * _LANES)
    if tile_r >= r:
        tile_r = r                       # single row-tile; equal-to-dim is legal
    else:
        tile_r = max(_SUBLANES, (tile_r // _SUBLANES) * _SUBLANES)
    vmem_limit = int(min(vmem_cap - (4 << 20), budget_total + (16 << 20)))
    return tile_r, vmem_limit


def dice_loss_with_logits(pred, mask):
    """pred, mask: (B, M, C, H, W). Returns scalar f32 loss."""
    if pred.ndim != 5:
        raise ValueError(
            f"Invalid input shape, we expect BxMxCxHxW. Got: {pred.shape}")
    if pred.shape[-2:] != mask.shape[-2:]:
        raise ValueError(
            f"input and target spatial shapes must match. Got: {pred.shape} / {mask.shape}")
    if pred.shape != mask.shape:
        raise ValueError(
            f"pred and mask must have identical shapes. Got: {pred.shape} / {mask.shape}")

    B, M, C, H, W = pred.shape
    k_true = C * H * W

    # Copy-free, native-layout view: (B, M, C, H, W) -> (B, M, K). No transpose.
    pred2 = pred.reshape(B, M, k_true)
    mask2 = mask.reshape(B, M, k_true)          # keep original dtype (bandwidth)

    k_pad = _round_up(k_true, _LANES)
    if k_pad != k_true:
        # Rare fallback (C*H*W not a multiple of 128): single pad pass; padded
        # columns are masked out inside the kernel so the pad value is irrelevant.
        pad = k_pad - k_true
        pred2 = jnp.pad(pred2, ((0, 0), (0, 0), (0, pad)))
        mask2 = jnp.pad(mask2, ((0, 0), (0, 0), (0, pad)))

    R = k_pad // _LANES
    # Sublane-filled view (contiguous reshape, free): (B, M, R, 128).
    pred4 = pred2.reshape(B, M, R, _LANES)
    mask4 = mask2.reshape(B, M, R, _LANES)

    bytes_per_elem = pred.dtype.itemsize + mask.dtype.itemsize
    tile_r, vmem_limit = _pick_tiling(R, M, bytes_per_elem)
    grid_r = pl.cdiv(R, tile_r)
    needs_mask = (k_pad != k_true) or (R % tile_r != 0)

    kernel = functools.partial(
        _dice_partial_kernel, tile_r=tile_r, k_true=k_true, needs_mask=needs_mask)

    total_elems = B * M * k_true
    in_bytes = (pred.size * pred.dtype.itemsize + mask.size * mask.dtype.itemsize)
    cost = pl.CostEstimate(
        flops=6 * total_elems,
        transcendentals=total_elems,
        bytes_accessed=in_bytes + 2 * B * M * _LANES * 4,
    )

    inter_out, card_out = pl.pallas_call(
        kernel,
        out_shape=(
            jax.ShapeDtypeStruct((B, M, _LANES), jnp.float32),
            jax.ShapeDtypeStruct((B, M, _LANES), jnp.float32),
        ),
        grid=(B, grid_r),
        in_specs=[
            pl.BlockSpec((pl.Squeezed(), M, tile_r, _LANES),
                         lambda b, n: (b, 0, n, 0)),
            pl.BlockSpec((pl.Squeezed(), M, tile_r, _LANES),
                         lambda b, n: (b, 0, n, 0)),
        ],
        out_specs=(
            pl.BlockSpec((pl.Squeezed(), M, _LANES), lambda b, n: (b, 0, 0)),
            pl.BlockSpec((pl.Squeezed(), M, _LANES), lambda b, n: (b, 0, 0)),
        ),
        compiler_params=pltpu.CompilerParams(
            dimension_semantics=("parallel", "arbitrary"),
            vmem_limit_bytes=vmem_limit,
        ),
        cost_estimate=cost,
    )(pred4, mask4)

    # Tiny epilogue in plain JAX: fold batch + lane partials, dice formula.
    inter = jnp.sum(inter_out, axis=(0, 2))     # (M,)
    card = jnp.sum(card_out, axis=(0, 2))       # (M,)
    dice = 2.0 * inter / (card + EPSILON)
    return 1.0 - jnp.mean(dice)


def _reference(pred, mask):
    prob = jax.nn.sigmoid(pred.astype(jnp.float32))
    t = mask.astype(jnp.float32)
    dims = (0, 2, 3, 4)
    inter = jnp.sum(prob * t, axis=dims)
    card = jnp.sum(prob + t, axis=dims)
    return 1.0 - jnp.mean(2.0 * inter / (card + EPSILON))


if __name__ == "__main__":
    key = jax.random.PRNGKey(0)
    k1, k2 = jax.random.split(key)
    B, M, C, H, W = 2, 3, 4, 16, 16
    pred = jax.random.normal(k1, (B, M, C, H, W), dtype=jnp.float32)
    mask = (jax.random.uniform(k2, (B, M, C, H, W)) > 0.5).astype(jnp.float32)

    loss = jax.block_until_ready(dice_loss_with_logits(pred, mask))
    ref = jax.block_until_ready(_reference(pred, mask))
    assert jnp.allclose(loss, ref, rtol=1e-5, atol=1e-6), (loss, ref)
    print("KERNEL_OK")
</pallas_src>

<mosaic_0001>
module attributes {stable_mosaic.version = 11 : i64} {
  func.func @_dice_partial_kernel(%arg0: i32, %arg1: i32, %arg2: memref<1x3x8x128xf32, #tpu.memory_space<vmem>>, %arg3: memref<1x3x8x128xf32, #tpu.memory_space<vmem>>, %arg4: memref<1x3x128xf32, #tpu.memory_space<vmem>>, %arg5: memref<1x3x128xf32, #tpu.memory_space<vmem>>) attributes {dimension_semantics = [#tpu.dimension_semantics<parallel>, #tpu.dimension_semantics<arbitrary>], iteration_bounds = array<i64: 2, 1>, scalar_prefetch = 0 : i64, scratch_operands = 0 : i64, tpu.core_type = #tpu.core_type<tc>, window_params = [{transform_indices = @transform_0, window_bounds = array<i64: 1, 3, 8, 128>}, {transform_indices = @transform_1, window_bounds = array<i64: 1, 3, 8, 128>}, {transform_indices = @transform_2, window_bounds = array<i64: 1, 3, 128>}, {transform_indices = @transform_3, window_bounds = array<i64: 1, 3, 128>}]} {
    %c0_i32 = arith.constant 0 : i32
    %0 = arith.cmpi eq, %arg1, %c0_i32 : i32
    %1 = arith.extui %0 : i1 to i32
    %c0_i32_0 = arith.constant 0 : i32
    %2 = arith.cmpi ne, %1, %c0_i32_0 : i32
    scf.if %2 {
      %cst_24 = arith.constant 0.000000e+00 : f32
      %30 = vector.broadcast %cst_24 : f32 to vector<3x128xf32>
      %c0_25 = arith.constant 0 : index
      %c0_26 = arith.constant 0 : index
      %c0_27 = arith.constant 0 : index
      %31 = vector.load %arg4[%c0_25, %c0_26, %c0_27] : memref<1x3x128xf32, #tpu.memory_space<vmem>>, vector<1x3x128xf32>
      %32 = vector.shape_cast %31 : vector<1x3x128xf32> to vector<3x128xf32>
      %33 = vector.shape_cast %30 : vector<3x128xf32> to vector<1x3x128xf32>
      tpu.vector_store %arg4[%c0_25, %c0_26, %c0_27], %33 {strides = array<i32>} : memref<1x3x128xf32, #tpu.memory_space<vmem>>, vector<1x3x128xf32>,
      %cst_28 = arith.constant 0.000000e+00 : f32
      %34 = vector.broadcast %cst_28 : f32 to vector<3x128xf32>
      %c0_29 = arith.constant 0 : index
      %c0_30 = arith.constant 0 : index
      %c0_31 = arith.constant 0 : index
      %35 = vector.load %arg5[%c0_29, %c0_30, %c0_31] : memref<1x3x128xf32, #tpu.memory_space<vmem>>, vector<1x3x128xf32>
      %36 = vector.shape_cast %35 : vector<1x3x128xf32> to vector<3x128xf32>
      %37 = vector.shape_cast %34 : vector<3x128xf32> to vector<1x3x128xf32>
      tpu.vector_store %arg5[%c0_29, %c0_30, %c0_31], %37 {strides = array<i32>} : memref<1x3x128xf32, #tpu.memory_space<vmem>>, vector<1x3x128xf32>,
    } else {
    }
    %c0 = arith.constant 0 : index
    %c0_1 = arith.constant 0 : index
    %c0_2 = arith.constant 0 : index
    %c0_3 = arith.constant 0 : index
    %3 = vector.load %arg2[%c0, %c0_1, %c0_2, %c0_3] : memref<1x3x8x128xf32, #tpu.memory_space<vmem>>, vector<1x3x8x128xf32>
    %4 = vector.shape_cast %3 : vector<1x3x8x128xf32> to vector<3x8x128xf32>
    %c0_4 = arith.constant 0 : index
    %c0_5 = arith.constant 0 : index
    %c0_6 = arith.constant 0 : index
    %c0_7 = arith.constant 0 : index
    %5 = vector.load %arg3[%c0_4, %c0_5, %c0_6, %c0_7] : memref<1x3x8x128xf32, #tpu.memory_space<vmem>>, vector<1x3x8x128xf32>
    %6 = vector.shape_cast %5 : vector<1x3x8x128xf32> to vector<3x8x128xf32>
    %cst = arith.constant 5.000000e-01 : f32
    %7 = vector.broadcast %cst : f32 to vector<3x8x128xf32>
    %8 = arith.mulf %7, %4 : vector<3x8x128xf32>
    %9 = math.tanh %8 : vector<3x8x128xf32>
    %cst_8 = arith.constant 1.000000e+00 : f32
    %10 = vector.broadcast %cst_8 : f32 to vector<3x8x128xf32>
    %11 = arith.addf %9, %10 : vector<3x8x128xf32>
    %cst_9 = arith.constant 5.000000e-01 : f32
    %12 = vector.broadcast %cst_9 : f32 to vector<3x8x128xf32>
    %13 = arith.mulf %12, %11 : vector<3x8x128xf32>
    %14 = arith.mulf %13, %6 : vector<3x8x128xf32>
    %15 = arith.addf %13, %6 : vector<3x8x128xf32>
    %c0_10 = arith.constant 0 : index
    %c0_11 = arith.constant 0 : index
    %c0_12 = arith.constant 0 : index
    %16 = vector.load %arg4[%c0_10, %c0_11, %c0_12] : memref<1x3x128xf32, #tpu.memory_space<vmem>>, vector<1x3x128xf32>
    %17 = vector.shape_cast %16 : vector<1x3x128xf32> to vector<3x128xf32>
    %cst_13 = arith.constant dense<0.000000e+00> : vector<3x128xf32>
    %18 = vector.multi_reduction <add>, %14, %cst_13 [1] : vector<3x8x128xf32> to vector<3x128xf32>
    %19 = arith.addf %17, %18 : vector<3x128xf32>
    %c0_14 = arith.constant 0 : index
    %c0_15 = arith.constant 0 : index
    %c0_16 = arith.constant 0 : index
    %20 = vector.load %arg4[%c0_14, %c0_15, %c0_16] : memref<1x3x128xf32, #tpu.memory_space<vmem>>, vector<1x3x128xf32>
    %21 = vector.shape_cast %20 : vector<1x3x128xf32> to vector<3x128xf32>
    %22 = vector.shape_cast %19 : vector<3x128xf32> to vector<1x3x128xf32>
    tpu.vector_store %arg4[%c0_14, %c0_15, %c0_16], %22 {strides = array<i32>} : memref<1x3x128xf32, #tpu.memory_space<vmem>>, vector<1x3x128xf32>,
    %c0_17 = arith.constant 0 : index
    %c0_18 = arith.constant 0 : index
    %c0_19 = arith.constant 0 : index
    %23 = vector.load %arg5[%c0_17, %c0_18, %c0_19] : memref<1x3x128xf32, #tpu.memory_space<vmem>>, vector<1x3x128xf32>
    %24 = vector.shape_cast %23 : vector<1x3x128xf32> to vector<3x128xf32>
    %cst_20 = arith.constant dense<0.000000e+00> : vector<3x128xf32>
    %25 = vector.multi_reduction <add>, %15, %cst_20 [1] : vector<3x8x128xf32> to vector<3x128xf32>
    %26 = arith.addf %24, %25 : vector<3x128xf32>
    %c0_21 = arith.constant 0 : index
    %c0_22 = arith.constant 0 : index
    %c0_23 = arith.constant 0 : index
    %27 = vector.load %arg5[%c0_21, %c0_22, %c0_23] : memref<1x3x128xf32, #tpu.memory_space<vmem>>, vector<1x3x128xf32>
    %28 = vector.shape_cast %27 : vector<1x3x128xf32> to vector<3x128xf32>
    %29 = vector.shape_cast %26 : vector<3x128xf32> to vector<1x3x128xf32>
    tpu.vector_store %arg5[%c0_21, %c0_22, %c0_23], %29 {strides = array<i32>} : memref<1x3x128xf32, #tpu.memory_space<vmem>>, vector<1x3x128xf32>,
    return
  }
  func.func @transform_0(%arg0: i32, %arg1: i32) -> (i32, i32, i32, i32) {
    %c0_i32 = arith.constant 0 : i32
    %c0_i32_0 = arith.constant 0 : i32
    %c0_i32_1 = arith.constant 0 : i32
    return %arg0, %c0_i32, %arg1, %c0_i32_0 : i32, i32, i32, i32
  }
  func.func @transform_1(%arg0: i32, %arg1: i32) -> (i32, i32, i32, i32) {
    %c0_i32 = arith.constant 0 : i32
    %c0_i32_0 = arith.constant 0 : i32
    %c0_i32_1 = arith.constant 0 : i32
    return %arg0, %c0_i32, %arg1, %c0_i32_0 : i32, i32, i32, i32
  }
  func.func @transform_2(%arg0: i32, %arg1: i32) -> (i32, i32, i32) {
    %c0_i32 = arith.constant 0 : i32
    %c0_i32_0 = arith.constant 0 : i32
    %c0_i32_1 = arith.constant 0 : i32
    return %arg0, %c0_i32, %c0_i32_0 : i32, i32, i32
  }
  func.func @transform_3(%arg0: i32, %arg1: i32) -> (i32, i32, i32) {
    %c0_i32 = arith.constant 0 : i32
    %c0_i32_0 = arith.constant 0 : i32
    %c0_i32_1 = arith.constant 0 : i32
    return %arg0, %c0_i32, %c0_i32_0 : i32, i32, i32
  }
}

</mosaic_0001>

<llo_original>
// kernel: tpu_custom_call.1
$region0: #{tpu_custom_call.1}
  #allocation0 [shape = 'u32[]', space=smem, size = 0x4, offset = 0x4, fixed_abs, tag = 'smem constant byte address 0x4 - core index']
  #allocation1 [shape = 'u32[144,128]{1,0:T(1,128)}', space=vmem, size = 0x12000, scoped, tag = 'internal scratch']
  %s0 = inlined_call_operand.hbm [shape: f32[2,3,8,128], index: 0, kind: input, shape index: {}]
  %s1 = inlined_call_operand.hbm [shape: f32[2,3,8,128], index: 1, kind: input, shape index: {}]
  %s2 = inlined_call_operand.vmem [shape: f32[2,3,128], index: 2, kind: output, shape index: {0}]
  %s3 = inlined_call_operand.vmem [shape: f32[2,3,128], index: 3, kind: output, shape index: {1}]
  %4 = xla_tuple %s2, %s3
  %s5 = sld [smem:[#allocation0]]
  $region61: #{tpu_custom_call.1} parent=0
    _
  %s7 = ssub.s32 1, %s5
  %s8 = scalar_select 0, %s7, %s5
  $region1: #{tpu_custom_call.1} parent=0
    #allocation2 [shape = 'u8[24576]{0}', space=vmem, size = 0x6000, scoped, tag = 'input window, operand 0']
    #allocation3 [shape = 's32[2]{0}', space=sflag, size = 0x8, scoped, tag = 'scoped memory for tpu_custom_call.1']
    #allocation4 [shape = 'u8[24576]{0}', space=vmem, size = 0x6000, scoped, tag = 'input window, operand 1']
    #allocation5 [shape = 's32[2]{0}', space=sflag, size = 0x8, scoped, tag = 'scoped memory for tpu_custom_call.1']
    %9 = vsyncpa [#allocation3], 0
    %s10 = scalar_lea.sflag [#allocation3], 1
    %11 = vsyncpa %s10, 0
    %12 = vsyncpa [#allocation5], 0
    %s13 = scalar_lea.sflag [#allocation5], 1
    %14 = vsyncpa %s13, 0
    loop: start=0, step=1, limit=4
    $region2: #{tpu_custom_call.1} parent=1 // loop_pre_header
      _
    $region3: #{tpu_custom_call.1} parent=1 // loop_header
      %s16 = sphi 0, %s20
      %p17 = scmp.ge.s32.totalorder %s16, 4
      %s23 = sphi 0, %s35
      %s24 = sphi 0, %s31
      %s25 = sphi 0, %s23
      %s26 = sphi 0, %s24
      %s27 = sphi 0, %s25
      %s28 = sphi 0, %s26
      %s40 = sphi 0, %s42
      %s43 = sphi 0, %s40
      %s44 = sphi 0, %s43
      %s60 = sphi 0, %s44
      %s68 = sphi 0, %s70
      %s71 = sphi 0, %s68
      %s72 = sphi 0, %s71
      %s88 = sphi 0, %s72
      %s94 = sphi 0, %s96
      %s97 = sphi 0, %s94
      %s98 = sphi 0, %s97
      %s114 = sphi 0, %s98
      %s120 = sphi 0, %s122
      %s123 = sphi 0, %s120
      %s124 = sphi 0, %s123
      %s140 = sphi 0, %s124
    $region4: #{tpu_custom_call.1} parent=1 // loop_header_branch
      %19 = sbr.rel (%p17) target = $region8
    $region5: #{tpu_custom_call.1} parent=1 // loop_body
      %s21 = ssub.s32 %s16, 1
      %s22 = ssub.s32 %s16, 2
      %s29 = sadd.s32 1, %s24
      %p30 = scmp.ge.s32.totalorder %s29, 1
      %s31 = scalar_select %p30, 0, %s29
      %s32 = sadd.s32 1, %s23
      %s33 = scalar_select %p30, %s32, %s23
      %p34 = scmp.ge.s32.totalorder %s33, 2
      %s35 = scalar_select %p34, 0, %s33
      %s36 = ssub.s32 %s23, %s35
      %s37 = ssub.s32 %s24, %s31
      %s38 = sor.u32 %s36, %s37
      %p39 = scmp.eq.s32.totalorder %s38, 0
      %s41 = sadd.s32 %s40, 1
      %s42 = scalar_select %p39, %s40, %s41
      %p45 = pneg %p39
      %p46 = scmp.eq.s32.totalorder %s16, 1
      %p47 = por %p45, %p46
      %p48 = scmp.ne.s32.totalorder %s40, %s43
      %p49 = scmp.eq.s32.totalorder %s16, 0
      %p50 = por %p48, %p49
      %p51 = scmp.ne.s32.totalorder %s40, %s43
      %p52 = scmp.eq.s32.totalorder %s21, 1
      %p53 = por %p51, %p52
      %p54 = scmp.ne.s32.totalorder %s43, %s44
      %p55 = scmp.eq.s32.totalorder %s21, 0
      %p56 = por %p54, %p55
      %p57 = scmp.ne.s32.totalorder %s43, %s44
      %p58 = scmp.eq.s32.totalorder %s22, 1
      %p59 = por %p57, %p58
      %p61 = scmp.ne.s32.totalorder %s44, %s60
      %p62 = scmp.eq.s32.totalorder %s22, 0
      %p63 = por %p61, %p62
      %s64 = ssub.s32 %s23, %s35
      %s65 = ssub.s32 %s24, %s31
      %s66 = sor.u32 %s64, %s65
      %p67 = scmp.eq.s32.totalorder %s66, 0
      %s69 = sadd.s32 %s68, 1
      %s70 = scalar_select %p67, %s68, %s69
      %p73 = pneg %p67
      %p74 = scmp.eq.s32.totalorder %s16, 1
      %p75 = por %p73, %p74
      %p76 = scmp.ne.s32.totalorder %s68, %s71
      %p77 = scmp.eq.s32.totalorder %s16, 0
      %p78 = por %p76, %p77
      %p79 = scmp.ne.s32.totalorder %s68, %s71
      %p80 = scmp.eq.s32.totalorder %s21, 1
      %p81 = por %p79, %p80
      %p82 = scmp.ne.s32.totalorder %s71, %s72
      %p83 = scmp.eq.s32.totalorder %s21, 0
      %p84 = por %p82, %p83
      %p85 = scmp.ne.s32.totalorder %s71, %s72
      %p86 = scmp.eq.s32.totalorder %s22, 1
      %p87 = por %p85, %p86
      %p89 = scmp.ne.s32.totalorder %s72, %s88
      %p90 = scmp.eq.s32.totalorder %s22, 0
      %p91 = por %p89, %p90
      %s92 = ssub.s32 %s23, %s35
      %p93 = scmp.eq.s32.totalorder %s92, 0
      %s95 = sadd.s32 %s94, 1
      %s96 = scalar_select %p93, %s94, %s95
      %p99 = pneg %p93
      %p100 = scmp.eq.s32.totalorder %s16, 1
      %p101 = por %p99, %p100
      %p102 = scmp.ne.s32.totalorder %s94, %s97
      %p103 = scmp.eq.s32.totalorder %s16, 0
      %p104 = por %p102, %p103
      %p105 = scmp.ne.s32.totalorder %s94, %s97
      %p106 = scmp.eq.s32.totalorder %s21, 1
      %p107 = por %p105, %p106
      %p108 = scmp.ne.s32.totalorder %s97, %s98
      %p109 = scmp.eq.s32.totalorder %s21, 0
      %p110 = por %p108, %p109
      %p111 = scmp.ne.s32.totalorder %s97, %s98
      %p112 = scmp.eq.s32.totalorder %s22, 1
      %p113 = por %p111, %p112
      %p115 = scmp.ne.s32.totalorder %s98, %s114
      %p116 = scmp.eq.s32.totalorder %s22, 0
      %p117 = por %p115, %p116
      %s118 = ssub.s32 %s23, %s35
      %p119 = scmp.eq.s32.totalorder %s118, 0
      %s121 = sadd.s32 %s120, 1
      %s122 = scalar_select %p119, %s120, %s121
      %p125 = pneg %p119
      %p126 = scmp.eq.s32.totalorder %s16, 1
      %p127 = por %p125, %p126
      %p128 = scmp.ne.s32.totalorder %s120, %s123
      %p129 = scmp.eq.s32.totalorder %s16, 0
      %p130 = por %p128, %p129
      %p131 = scmp.ne.s32.totalorder %s120, %s123
      %p132 = scmp.eq.s32.totalorder %s21, 1
      %p133 = por %p131, %p132
      %p134 = scmp.ne.s32.totalorder %s123, %s124
      %p135 = scmp.eq.s32.totalorder %s21, 0
      %p136 = por %p134, %p135
      %p137 = scmp.ne.s32.totalorder %s123, %s124
      %p138 = scmp.eq.s32.totalorder %s22, 1
      %p139 = por %p137, %p138
      %p141 = scmp.ne.s32.totalorder %s124, %s140
      %p142 = scmp.eq.s32.totalorder %s22, 0
      %p143 = por %p141, %p142
      %p144 = scmp.le.s32.totalorder 1, %s16
      %p145 = scmp.lt.s32.totalorder %s16, 3
      %p146 = pnand %p144, %p145
      %p147 = pneg %p146
      // Predicated region
      $region9: #{tpu_custom_call.1} parent=5 // pred_check
        _
      $region10: #{tpu_custom_call.1} parent=5 // pred_check_branch
        %149 = sbr.rel (%p146) target = $region12
      $region11: #{tpu_custom_call.1} parent=5 // pred_region
        %s150 = ssub.s32 %s16, 1
      $region12: #{tpu_custom_call.1} parent=5 // pred_fallthru
        _
      %p151 = scmp.lt.s32.totalorder %s16, 2
      // Predicated region
      $region13: #{tpu_custom_call.1} parent=5 // pred_check
        %p152 = pneg %p151
      $region14: #{tpu_custom_call.1} parent=5 // pred_check_branch
        %154 = sbr.rel (%p152) target = $region16
      $region15: #{tpu_custom_call.1} parent=5 // pred_region
        // Predicated region
        $region17: #{tpu_custom_call.1} parent=15 // pred_check
          %p155 = pneg %p50
        $region18: #{tpu_custom_call.1} parent=15 // pred_check_branch
          %157 = sbr.rel (%p155) target = $region20
        $region19: #{tpu_custom_call.1} parent=15 // pred_region
          %s158 = sand.u32 %s40, 1
          %s159 = scalar_lea.sflag [#allocation3], %s158
          %s160 = sand.u32 %s40, 1
          %s161 = smul.addr %s160, 24
          %s162 = scalar_lea.vmem [#allocation2], %s161
          %s164 = ssub.s32 384, 384
          %165 = vsyncadd %s159, %s164
          %s166 = smul.addr %s23, 3
          %s167 = sadd.s32 %s24, %s166
          %s168 = smul.addr %s167, 128
          %s169 = scalar_lea.hbm %s0, %s168
          %s170 = sshll.u32 %s162, 4
          %s171 = int_to_ptr.vmem [resolvable:$true] %s170
          %176 = dma.hbm_to_vmem [thread:$0]  %s169, 384, %s171, %s159, 128, 128, 8
        $region20: #{tpu_custom_call.1} parent=15 // pred_fallthru
          _
        // Predicated region
        $region21: #{tpu_custom_call.1} parent=15 // pred_check
          %p177 = pneg %p78
        $region22: #{tpu_custom_call.1} parent=15 // pred_check_branch
          %179 = sbr.rel (%p177) target = $region24
        $region23: #{tpu_custom_call.1} parent=15 // pred_region
          %s180 = sand.u32 %s68, 1
          %s181 = scalar_lea.sflag [#allocation5], %s180
          %s182 = sand.u32 %s68, 1
          %s183 = smul.addr %s182, 24
          %s184 = scalar_lea.vmem [#allocation4], %s183
          %s186 = ssub.s32 384, 384
          %187 = vsyncadd %s181, %s186
          %s188 = smul.addr %s23, 3
          %s189 = sadd.s32 %s24, %s188
          %s190 = smul.addr %s189, 128
          %s191 = scalar_lea.hbm %s1, %s190
          %s192 = sshll.u32 %s184, 4
          %s193 = int_to_ptr.vmem [resolvable:$true] %s192
          %198 = dma.hbm_to_vmem [thread:$0]  %s191, 384, %s193, %s181, 128, 128, 8
        $region24: #{tpu_custom_call.1} parent=15 // pred_fallthru
          _
      $region16: #{tpu_custom_call.1} parent=5 // pred_fallthru
        _
      %p199 = scmp.le.s32.totalorder 1, %s16
      %p200 = scmp.lt.s32.totalorder %s16, 3
      %p201 = pnand %p199, %p200
      %p202 = pneg %p201
      // Predicated region
      $region25: #{tpu_custom_call.1} parent=5 // pred_check
        _
      $region26: #{tpu_custom_call.1} parent=5 // pred_check_branch
        %204 = sbr.rel (%p201) target = $region28
      $region27: #{tpu_custom_call.1} parent=5 // pred_region
        %s205 = ssub.s32 %s16, 1
        %s206 = sand.u32 %s43, 1
        %s207 = scalar_lea.sflag [#allocation3], %s206
        %s208 = sand.u32 %s43, 1
        %s209 = smul.addr %s208, 24
        %s210 = scalar_lea.vmem [#allocation2], %s209
        // Predicated region
        $region29: #{tpu_custom_call.1} parent=27 // pred_check
          %p211 = pneg %p56
        $region30: #{tpu_custom_call.1} parent=27 // pred_check_branch
          %213 = sbr.rel (%p211) target = $region32
        $region31: #{tpu_custom_call.1} parent=27 // pred_region
          %214 = dma.done %s207, 384
        $region32: #{tpu_custom_call.1} parent=27 // pred_fallthru
          _
        %s215 = sand.u32 %s71, 1
        %s216 = scalar_lea.sflag [#allocation5], %s215
        %s217 = sand.u32 %s71, 1
        %s218 = smul.addr %s217, 24
        %s219 = scalar_lea.vmem [#allocation4], %s218
        // Predicated region
        $region33: #{tpu_custom_call.1} parent=27 // pred_check
          %p220 = pneg %p84
        $region34: #{tpu_custom_call.1} parent=27 // pred_check_branch
          %222 = sbr.rel (%p220) target = $region36
        $region35: #{tpu_custom_call.1} parent=27 // pred_region
          %223 = dma.done %s216, 384
        $region36: #{tpu_custom_call.1} parent=27 // pred_fallthru
          _
        %s224 = sand.u32 %s43, 1
        %s225 = scalar_lea.sflag [#allocation3], %s224
        %s226 = sand.u32 %s43, 1
        %s227 = smul.addr %s226, 24
        %s228 = scalar_lea.vmem [#allocation2], %s227
        %p229 = pneg %p56
        %p230 = pneg %p53
        %s231 = sand.u32 %s71, 1
        %s232 = scalar_lea.sflag [#allocation5], %s231
        %s233 = sand.u32 %s71, 1
        %s234 = smul.addr %s233, 24
        %s235 = scalar_lea.vmem [#allocation4], %s234
        %p236 = pneg %p84
        %p237 = pneg %p81
        %p238 = pneg %p110
        %p239 = pneg %p107
        %p240 = scmp.lt.s32.totalorder %s25, 1
        %s241 = scalar_select %p240, %s25, 1
        %s242 = smul.addr %s241, 4
        %s243 = scalar_lea.vmem %s2, %s242
        %p244 = pneg %p136
        %p245 = pneg %p133
        %p246 = scmp.lt.s32.totalorder %s25, 1
        %s247 = scalar_select %p246, %s25, 1
        %s248 = smul.addr %s247, 4
        %s249 = scalar_lea.vmem %s3, %s248
        %p250 = scmp.lt.s32.totalorder %s25, 1
        %s251 = scalar_select %p250, %s25, 1
        %s252 = smul.addr %s251, 4
        %s253 = scalar_lea.vmem %s2, %s252
        %p254 = scmp.lt.s32.totalorder %s25, 1
        %s255 = scalar_select %p254, %s25, 1
        %s256 = smul.addr %s255, 4
        %s257 = scalar_lea.vmem %s3, %s256
        %p258 = scmp.eq.s32.totalorder %s26, 0
        // Predicated region
        $region37: #{tpu_custom_call.1} parent=27 // pred_check
          %p259 = pneg %p258
        $region38: #{tpu_custom_call.1} parent=27 // pred_check_branch
          %261 = sbr.rel (%p259) target = $region40
        $region39: #{tpu_custom_call.1} parent=27 // pred_region
          %262 = vst [vmem:[%s253] sm:$0x7] 0.0
          %263 = vst [vmem:[%s257] sm:$0x7] 0.0
        $region40: #{tpu_custom_call.1} parent=27 // pred_fallthru
          _
        %v264 = vld [vmem:[%s210] sm:$0xff]
        %v265 = vld [vmem:[%s210 + $0x8] sm:$0xff]
        %v266 = vld [vmem:[%s210 + $0x10] sm:$0xff]
        %v267 = vld [vmem:[%s219] sm:$0xff]
        %v268 = vld [vmem:[%s219 + $0x8] sm:$0xff]
        %v269 = vld [vmem:[%s219 + $0x10] sm:$0xff]
        %v270 = vmul.f32 %v264, 0.5
        %v271 = vmul.f32 %v265, 0.5
        %v272 = vmul.f32 %v266, 0.5
        %v273 = vtanh.pop %v270
        %v274 = vtanh.pop %v271
        %v275 = vtanh.pop %v272
        %v276 = vadd.f32 %v273, 1.0
        %v277 = vadd.f32 %v274, 1.0
        %v278 = vadd.f32 %v275, 1.0
        %v279 = vmul.f32 %v276, 0.5
        %v280 = vmul.f32 %v277, 0.5
        %v281 = vmul.f32 %v278, 0.5
        %v282 = vmul.f32 %v279, %v267
        %v283 = vmul.f32 %v280, %v268
        %v284 = vmul.f32 %v281, %v269
        %v285 = vadd.f32 %v279, %v267
        %v286 = vadd.f32 %v280, %v268
        %v287 = vadd.f32 %v281, %v269
        %v288 = vld [vmem:[%s253] sm:$0x7]
        %v289 = vrot.slane %v282, 4
        %v290 = vadd.f32 %v282, %v289
        %v291 = vrot.slane %v290, 2
        %v292 = vadd.f32 %v290, %v291
        %v293 = vrot.slane %v292, 1
        %v294 = vadd.f32 %v292, %v293
        %v295 = vrot.slane %v283, 4
        %v296 = vadd.f32 %v283, %v295
        %v297 = vrot.slane %v296, 2
        %v298 = vadd.f32 %v296, %v297
        %v299 = vrot.slane %v298, 1
        %v300 = vadd.f32 %v298, %v299
        %v301 = vrot.slane %v284, 4
        %v302 = vadd.f32 %v284, %v301
        %v303 = vrot.slane %v302, 2
        %v304 = vadd.f32 %v302, %v303
        %v305 = vrot.slane %v304, 1
        %v306 = vadd.f32 %v304, %v305
        %vm310 = vcmask 1041409
        %v311 = vsel %vm310, %v300, %v294
        %vm312 = vcmask 1042434
        %v313 = vsel %vm312, %v306, %v311
        %v315 = vadd.f32 %v288, %v313
        %316 = vst [vmem:[%s253] sm:$0x7] %v315
        %v317 = vld [vmem:[%s257] sm:$0x7]
        %v318 = vrot.slane %v285, 4
        %v319 = vadd.f32 %v285, %v318
        %v320 = vrot.slane %v319, 2
        %v321 = vadd.f32 %v319, %v320
        %v322 = vrot.slane %v321, 1
        %v323 = vadd.f32 %v321, %v322
        %v324 = vrot.slane %v286, 4
        %v325 = vadd.f32 %v286, %v324
        %v326 = vrot.slane %v325, 2
        %v327 = vadd.f32 %v325, %v326
        %v328 = vrot.slane %v327, 1
        %v329 = vadd.f32 %v327, %v328
        %v330 = vrot.slane %v287, 4
        %v331 = vadd.f32 %v287, %v330
        %v332 = vrot.slane %v331, 2
        %v333 = vadd.f32 %v331, %v332
        %v334 = vrot.slane %v333, 1
        %v335 = vadd.f32 %v333, %v334
        %v339 = vsel %vm310, %v329, %v323
        %v340 = vsel %vm312, %v335, %v339
        %v342 = vadd.f32 %v317, %v340
        %343 = vst [vmem:[%s257] sm:$0x7] %v342
        %p344 = scmp.lt.s32.totalorder %s25, 1
        %s345 = scalar_select %p344, %s25, 1
        %s346 = smul.addr %s345, 4
        %s347 = scalar_lea.vmem %s2, %s346
        %p348 = scmp.lt.s32.totalorder %s25, 1
        %s349 = scalar_select %p348, %s25, 1
        %s350 = smul.addr %s349, 4
        %s351 = scalar_lea.vmem %s3, %s350
        // Predicated region
        $region41: #{tpu_custom_call.1} parent=27 // pred_check
          %p352 = pneg %p107
        $region42: #{tpu_custom_call.1} parent=27 // pred_check_branch
          %354 = sbr.rel (%p352) target = $region44
        $region43: #{tpu_custom_call.1} parent=27 // pred_region
          _
        $region44: #{tpu_custom_call.1} parent=27 // pred_fallthru
          _
        // Predicated region
        $region45: #{tpu_custom_call.1} parent=27 // pred_check
          %p355 = pneg %p133
        $region46: #{tpu_custom_call.1} parent=27 // pred_check_branch
          %357 = sbr.rel (%p355) target = $region48
        $region47: #{tpu_custom_call.1} parent=27 // pred_region
          _
        $region48: #{tpu_custom_call.1} parent=27 // pred_fallthru
          _
      $region28: #{tpu_custom_call.1} parent=5 // pred_fallthru
        _
      %p358 = scmp.le.s32.totalorder 2, %s16
      // Predicated region
      $region49: #{tpu_custom_call.1} parent=5 // pred_check
        %p359 = pneg %p358
      $region50: #{tpu_custom_call.1} parent=5 // pred_check_branch
        %361 = sbr.rel (%p359) target = $region52
      $region51: #{tpu_custom_call.1} parent=5 // pred_region
        %s362 = ssub.s32 %s16, 2
        // Predicated region
        $region53: #{tpu_custom_call.1} parent=51 // pred_check
          %p363 = pneg %p113
        $region54: #{tpu_custom_call.1} parent=51 // pred_check_branch
          %365 = sbr.rel (%p363) target = $region56
        $region55: #{tpu_custom_call.1} parent=51 // pred_region
          %p366 = scmp.lt.s32.totalorder %s27, 1
          %s367 = scalar_select %p366, %s27, 1
          %s368 = smul.addr %s367, 4
          %s369 = scalar_lea.vmem %s2, %s368
        $region56: #{tpu_custom_call.1} parent=51 // pred_fallthru
          _
        // Predicated region
        $region57: #{tpu_custom_call.1} parent=51 // pred_check
          %p370 = pneg %p139
        $region58: #{tpu_custom_call.1} parent=51 // pred_check_branch
          %372 = sbr.rel (%p370) target = $region60
        $region59: #{tpu_custom_call.1} parent=51 // pred_region
          %p373 = scmp.lt.s32.totalorder %s27, 1
          %s374 = scalar_select %p373, %s27, 1
          %s375 = smul.addr %s374, 4
          %s376 = scalar_lea.vmem %s3, %s375
        $region60: #{tpu_custom_call.1} parent=51 // pred_fallthru
          _
      $region52: #{tpu_custom_call.1} parent=5 // pred_fallthru
        _
    $region6: #{tpu_custom_call.1} parent=1 // loop_footer
      %s20 = sadd.s32 1, %s16
    $region7: #{tpu_custom_call.1} parent=1 // loop_footer_branch
      %15 = sbr.rel target = $region3
    $region8: #{tpu_custom_call.1} parent=1 // loop_exit
      _
    %377 = vsyncpa [#allocation3], 1
    %s378 = scalar_lea.sflag [#allocation3], 1
    %379 = vsyncpa %s378, 1
    %380 = vsyncpa [#allocation5], 1
    %s381 = scalar_lea.sflag [#allocation5], 1
    %382 = vsyncpa %s381, 1

</llo_original>
